<compile_context>
chip_gen: v7x
topology: tpu7x:2x2x1
jax: 0.10.0
libtpu: 0.0.40
codegen_flags: <defaults>
</compile_context>

<pallas_src>
import functools

import jax
import jax.numpy as jnp
from jax import lax
from jax.experimental import pallas as pl
from jax.experimental.pallas import tpu as pltpu


def _round_up(x, m):
    return (x + m - 1) // m * m


def _make_encoder_kernel(kernel_sizes, num_layers, B_blk, L, E, V_pad,
                         D, D_pad, H_pad, F_, mm_dtype):
    """Builds the Pallas kernel body (static hyper-params baked in)."""
    max_k = max(kernel_sizes)
    n_rows = B_blk * L

    def kernel(tok_ref,        # [n_rows, 1] int32 token ids (VMEM)
               tab_ref,        # [V_pad, E] embedding table (VMEM, replicated)
               wconv_ref,      # [max_k*E, D_pad] fused conv tap weights
               bconv_ref,      # [1, D_pad] fused conv bias
               *rest):
        hw = []
        idx = 0
        for _ in range(num_layers):
            hw.append((rest[idx], rest[idx + 1]))  # ([D_pad,2*D_pad],[1,2*D_pad])
            idx += 2
        ln_g, ln_b, fc_w, fc_b, out_ref = rest[idx:idx + 5]

        # ---- embedding gather as one one-hot MXU matmul ---------------------
        vocab_iota = lax.broadcasted_iota(jnp.int32, (n_rows, V_pad), 1)
        one_hot = (tok_ref[...] == vocab_iota).astype(mm_dtype)
        x = jnp.dot(one_hot, tab_ref[...],
                    preferred_element_type=jnp.float32)          # [n_rows, E]
        x = x.astype(mm_dtype)

        # ---- Conv1d as im2col: input-side rolls (E-wide), ONE matmul --------
        # x_cat[:, tau*E:(tau+1)*E] = x shifted forward by tau rows; wrap-around
        # rows only pollute time positions masked before the max-pool.
        cols = [x]
        for tau in range(1, max_k):
            cols.append(pltpu.roll(x, shift=n_rows - tau, axis=0))
        x_cat = jnp.concatenate(cols, axis=1) if max_k > 1 else x
        acc = jnp.dot(x_cat, wconv_ref[...],
                      preferred_element_type=jnp.float32)        # [n_rows, D_pad]
        acc = jnp.maximum(acc + bconv_ref[...], 0.0)             # bias + ReLU

        # ---- masked max-pool over time (masks = compile-time iota consts) ---
        acc3 = acc.reshape(B_blk, L, D_pad)
        t_iota = lax.broadcasted_iota(jnp.int32, (B_blk, L, D_pad), 1)
        c_iota = lax.broadcasted_iota(jnp.int32, (1, 1, D_pad), 2)
        thresh = jnp.zeros((1, 1, D_pad), jnp.int32)
        for j, k in enumerate(kernel_sizes):
            in_branch = (c_iota >= j * F_) & (c_iota < (j + 1) * F_)
            thresh = jnp.where(in_branch, L - k + 1, thresh)
        # ReLU output >= 0 and L >= max(kernel_sizes) (asserted in wrapper), so
        # every real column has >=1 valid position and 0 is a safe neutral.
        pooled = jnp.max(jnp.where(t_iota < thresh, acc3, 0.0), axis=1)

        # ---- Highway layers (h/t projections fused into one matmul) ---------
        xh = pooled                                              # [B_blk, D_pad]
        for w_ref, b_ref in hw:
            y = jnp.dot(xh.astype(mm_dtype), w_ref[...],
                        preferred_element_type=jnp.float32) + b_ref[...]
            h = jnp.maximum(y[:, :D_pad], 0.0)
            t = jax.nn.sigmoid(y[:, D_pad:])
            xh = xh + t * (h - xh)                    # == t*h + (1-t)*x

        # ---- LayerNorm over the REAL D columns (padded cols are exactly 0) --
        col_valid = lax.broadcasted_iota(jnp.int32, (1, D_pad), 1) < D
        mean = jnp.sum(xh, axis=-1, keepdims=True) * (1.0 / D)
        cen = jnp.where(col_valid, xh - mean, 0.0)
        var = jnp.sum(cen * cen, axis=-1, keepdims=True) * (1.0 / D)
        xn = (xh - mean) * lax.rsqrt(var + 1e-5)
        xn = xn * ln_g[...] + ln_b[...]          # padded cols -> 0 (ln_g pad=0)

        # ---- Dropout(eval=identity) + Linear (lane-dense H_pad output) ------
        logits = jnp.dot(xn.astype(mm_dtype), fc_w[...],
                         preferred_element_type=jnp.float32) + fc_b[...]
        out_ref[...] = logits.reshape(1, B_blk, H_pad)

    return kernel


def cnnh_encoder_forward(tokens, params, *, kernel_sizes, num_layers,
                         num_support, b_block=None, use_bf16_matmul=False):
    """Full forward. Token ids -> (support logits, query logits)."""
    emb_table = params["embedding"]                  # [V, E] (row 0 == 0)
    B, L = tokens.shape
    V, E = emb_table.shape
    F_ = params["conv_w"][0].shape[2]
    nk = len(kernel_sizes)
    D = F_ * nk
    H = params["fc_w"].shape[1]
    max_k = max(kernel_sizes)
    assert L >= max_k, "sequence length must cover the widest conv kernel"

    D_pad = _round_up(D, 128)
    H_pad = _round_up(H, 128)
    V_pad = _round_up(V, 8)

    if b_block is None:
        b_block = B                                  # serial grid: one step
    assert B % b_block == 0, "batch must be divisible by the batch block"
    assert b_block == B or (b_block * L) % 8 == 0, "token block must be 8-row aligned"
    nb = B // b_block
    n_rows = b_block * L

    mm_dtype = jnp.bfloat16 if use_bf16_matmul else jnp.float32
    f32 = jnp.float32

    # ---- one-time parameter fusion / padding (wrapper-side plumbing) -------
    # bf16 mode also quantizes the embedding table (conv inputs), documented.
    table = jnp.zeros((V_pad, E), f32).at[:V].set(emb_table).astype(mm_dtype)

    # Fused conv taps: rows [tau*E:(tau+1)*E] hold tap tau for all branches;
    # branch j occupies columns [j*F:(j+1)*F]; zero elsewhere (incl. D..D_pad).
    w_taps = jnp.zeros((max_k, E, D_pad), f32)
    for j, (w, k) in enumerate(zip(params["conv_w"], kernel_sizes)):
        w_taps = w_taps.at[:k, :, j * F_:(j + 1) * F_].set(w)
    # TODO(synk): at realistic sizes, also pad K = max_k*E toward 256 (v6e/v7x
    # MXU depth) when it helps; not worth it at K=max_k*E here.
    w_conv = w_taps.reshape(max_k * E, D_pad).astype(mm_dtype)
    b_conv = jnp.zeros((1, D_pad), f32).at[:, :D].set(
        jnp.concatenate(params["conv_b"], axis=1))

    hw_fused = []
    for (wh, bh, wt, bt) in params["highway"]:
        W = jnp.zeros((D_pad, 2 * D_pad), f32)
        W = W.at[:D, :D].set(wh).at[:D, D_pad:D_pad + D].set(wt)
        bvec = jnp.zeros((1, 2 * D_pad), f32)
        bvec = bvec.at[:, :D].set(bh).at[:, D_pad:D_pad + D].set(bt)
        hw_fused += [W.astype(mm_dtype), bvec]

    ln_g = jnp.zeros((1, D_pad), f32).at[:, :D].set(params["ln_g"])
    ln_b = jnp.zeros((1, D_pad), f32).at[:, :D].set(params["ln_b"])
    fc_w = jnp.zeros((D_pad, H_pad), f32).at[:D, :H].set(params["fc_w"]).astype(mm_dtype)
    fc_b = jnp.zeros((1, H_pad), f32).at[:, :H].set(params["fc_b"])

    tok_col = tokens.reshape(B * L, 1).astype(jnp.int32)   # 1 column, 8-aligned rows

    kernel = _make_encoder_kernel(kernel_sizes, num_layers, b_block, L, E,
                                  V_pad, D, D_pad, H_pad, F_, mm_dtype)

    def rep(shape):  # parameter replicated across the batch grid
        n = len(shape)
        # Constant index_map: Pallas fetches once per buffer; with grid=(1,)
        # double buffering is moot (pl.Buffered(1) knob left at default).
        return pl.BlockSpec(shape, lambda b, _n=n: (0,) * _n)

    in_specs = [
        pl.BlockSpec((n_rows, 1), lambda b: (b, 0)),   # token ids (VMEM)
        rep((V_pad, E)),                               # embedding table
        rep((max_k * E, D_pad)),                       # fused conv taps
        rep((1, D_pad)),                               # fused conv bias
        *[rep(a.shape) for a in hw_fused],             # highway fused w/b
        rep((1, D_pad)), rep((1, D_pad)),              # ln gamma / beta
        rep((D_pad, H_pad)), rep((1, H_pad)),          # fc w / b
    ]

    # vmem limit derived from actual shapes (v7x: only 64 MiB VMEM per TC).
    param_arrays = [table, w_conv, b_conv, *hw_fused, ln_g, ln_b, fc_w, fc_b]
    block_bytes = sum(int(a.size) * a.dtype.itemsize for a in param_arrays)
    block_bytes += n_rows * 4 + b_block * H_pad * 4
    inter_bytes = n_rows * (V_pad + 2 * max_k * E + 3 * D_pad) * 4
    vmem_limit = int(min(64 << 20, max(16 << 20, 2 * block_bytes + inter_bytes)))

    grid_spec = pltpu.PrefetchScalarGridSpec(
        num_scalar_prefetch=0,
        grid=(nb,),
        in_specs=in_specs,
        out_specs=pl.BlockSpec((1, b_block, H_pad), lambda b: (b, 0, 0)),
    )

    logits = pl.pallas_call(
        kernel,
        grid_spec=grid_spec,
        out_shape=jax.ShapeDtypeStruct((nb, b_block, H_pad), jnp.float32),
        compiler_params=pltpu.CompilerParams(
            dimension_semantics=("parallel",),   # shard batch grid across TCs
            vmem_limit_bytes=vmem_limit),
    )(tok_col, table, w_conv, b_conv, *hw_fused, ln_g, ln_b, fc_w, fc_b)

    logits = logits.reshape(B, H_pad)[:, :H]
    return logits[:num_support], logits[num_support:]


def _reference_forward(tokens, params, *, kernel_sizes, num_layers,
                       num_support):
    """Pure-JAX f32 reference mirroring the PyTorch forward (verification)."""
    emb = params["embedding"][tokens]                # [B, L, E]
    B, L, E = emb.shape
    pooled = []
    for (w, b), k in zip(zip(params["conv_w"], params["conv_b"]), kernel_sizes):
        Lout = L - k + 1
        F_ = w.shape[2]
        acc = jnp.zeros((B, Lout, F_), jnp.float32)
        for tau in range(k):
            acc = acc + jnp.einsum("ble,ef->blf", emb[:, tau:tau + Lout, :],
                                   w[tau])
        acc = jnp.maximum(acc + b.reshape(1, 1, F_), 0.0)
        pooled.append(jnp.max(acc, axis=1))
    x = jnp.concatenate(pooled, axis=1)
    for (wh, bh, wt, bt) in params["highway"]:
        h = jnp.maximum(x @ wh + bh, 0.0)
        t = jax.nn.sigmoid(x @ wt + bt)
        x = t * h + (1.0 - t) * x
    mean = jnp.mean(x, axis=-1, keepdims=True)
    var = jnp.mean((x - mean) ** 2, axis=-1, keepdims=True)
    x = (x - mean) * lax.rsqrt(var + 1e-5)
    x = x * params["ln_g"] + params["ln_b"]
    logits = x @ params["fc_w"] + params["fc_b"]
    return logits[:num_support], logits[num_support:]


def init_params(key, *, vocab_size, embed_size, num_filters, kernel_sizes,
                num_layers, hidden_size):
    """Deterministic synthetic parameter init (no checkpoint loading)."""
    D = num_filters * len(kernel_sizes)
    keys = iter(jax.random.split(key, 64))

    emb = jax.random.normal(next(keys), (vocab_size, embed_size),
                            jnp.float32) * 0.1
    emb = emb.at[0].set(0.0)                          # padding_idx=0

    conv_w, conv_b = [], []
    for k in kernel_sizes:
        # PyTorch Conv1d weight is [F, E, k]; stored here as [k, E, F] so
        # each tap is a plain [E, F] matmul.
        w = jax.random.normal(next(keys), (k, embed_size, num_filters),
                              jnp.float32) * 0.1
        b = jax.random.normal(next(keys), (1, num_filters), jnp.float32) * 0.01
        conv_w.append(w)
        conv_b.append(b)

    highway = []
    for _ in range(num_layers):
        wh = jax.random.normal(next(keys), (D, D), jnp.float32) * 0.1
        bh = jax.random.normal(next(keys), (1, D), jnp.float32) * 0.01
        wt = jax.random.normal(next(keys), (D, D), jnp.float32) * 0.1
        bt = jnp.full((1, D), -1.0, jnp.float32)      # common highway gate bias
        highway.append((wh, bh, wt, bt))

    ln_g = jnp.ones((1, D), jnp.float32)
    ln_b = jnp.zeros((1, D), jnp.float32)
    fc_w = jax.random.normal(next(keys), (D, hidden_size), jnp.float32) * 0.1
    fc_b = jax.random.normal(next(keys), (1, hidden_size), jnp.float32) * 0.01

    return {"embedding": emb, "conv_w": conv_w, "conv_b": conv_b,
            "highway": highway, "ln_g": ln_g, "ln_b": ln_b,
            "fc_w": fc_w, "fc_b": fc_b}


if __name__ == "__main__":
    # Small, module-consistent hyper-params.
    num_classes = 2
    num_support_per_class = 2
    num_support = num_classes * num_support_per_class   # 4
    num_query = 2
    B = num_support + num_query                          # 6
    L = 16
    vocab_size = 50
    embed_size = 32
    num_filters = 16
    kernel_sizes = (2, 3)
    num_layers = 1
    hidden_size = 32

    key = jax.random.PRNGKey(0)
    pkey, tkey = jax.random.split(key)
    params = init_params(pkey, vocab_size=vocab_size, embed_size=embed_size,
                         num_filters=num_filters, kernel_sizes=kernel_sizes,
                         num_layers=num_layers, hidden_size=hidden_size)
    tokens = jax.random.randint(tkey, (B, L), 0, vocab_size, dtype=jnp.int32)

    fwd = functools.partial(cnnh_encoder_forward, kernel_sizes=kernel_sizes,
                            num_layers=num_layers, num_support=num_support)

    # f32 path (exact module semantics); b_block defaults to B -> grid=(1,).
    support, query = fwd(tokens, params)
    jax.block_until_ready((support, query))

    ref_support, ref_query = _reference_forward(
        tokens, params, kernel_sizes=kernel_sizes,
        num_layers=num_layers, num_support=num_support)
    assert support.shape == (num_support, hidden_size)
    assert query.shape == (num_query, hidden_size)
    assert jnp.allclose(support, ref_support, atol=1e-4), "support mismatch"
    assert jnp.allclose(query, ref_query, atol=1e-4), "query mismatch"

    # bf16-operand path (v6e/v7x perf knob; f32 accumulation & f32 LayerNorm;
    # embedding table is quantized to bf16 in this mode).
    s16, q16 = fwd(tokens, params, use_bf16_matmul=True)
    jax.block_until_ready((s16, q16))
    assert jnp.allclose(s16, ref_support, atol=2e-1), "bf16 support mismatch"
    assert jnp.allclose(q16, ref_query, atol=2e-1), "bf16 query mismatch"

    print("KERNEL_OK")
</pallas_src>

<mosaic_0001>
module attributes {stable_mosaic.version = 11 : i64} {
  func.func @kernel(%arg0: i32, %arg1: memref<96x1xi32, #tpu.memory_space<vmem>>, %arg2: memref<56x32xf32, #tpu.memory_space<vmem>>, %arg3: memref<96x128xf32, #tpu.memory_space<vmem>>, %arg4: memref<1x128xf32, #tpu.memory_space<vmem>>, %arg5: memref<128x256xf32, #tpu.memory_space<vmem>>, %arg6: memref<1x256xf32, #tpu.memory_space<vmem>>, %arg7: memref<1x128xf32, #tpu.memory_space<vmem>>, %arg8: memref<1x128xf32, #tpu.memory_space<vmem>>, %arg9: memref<128x128xf32, #tpu.memory_space<vmem>>, %arg10: memref<1x128xf32, #tpu.memory_space<vmem>>, %arg11: memref<1x6x128xf32, #tpu.memory_space<vmem>>) attributes {dimension_semantics = [#tpu.dimension_semantics<parallel>], iteration_bounds = array<i64: 1>, scalar_prefetch = 0 : i64, scratch_operands = 0 : i64, tpu.core_type = #tpu.core_type<tc>, window_params = [{transform_indices = @transform_0, window_bounds = array<i64: 96, 1>}, {pipeline_mode = #tpu.pipeline_mode<synchronous>, transform_indices = @transform_1, window_bounds = array<i64: 56, 32>}, {pipeline_mode = #tpu.pipeline_mode<synchronous>, transform_indices = @transform_2, window_bounds = array<i64: 96, 128>}, {pipeline_mode = #tpu.pipeline_mode<synchronous>, transform_indices = @transform_3, window_bounds = array<i64: 1, 128>}, {pipeline_mode = #tpu.pipeline_mode<synchronous>, transform_indices = @transform_4, window_bounds = array<i64: 128, 256>}, {pipeline_mode = #tpu.pipeline_mode<synchronous>, transform_indices = @transform_5, window_bounds = array<i64: 1, 256>}, {pipeline_mode = #tpu.pipeline_mode<synchronous>, transform_indices = @transform_6, window_bounds = array<i64: 1, 128>}, {pipeline_mode = #tpu.pipeline_mode<synchronous>, transform_indices = @transform_7, window_bounds = array<i64: 1, 128>}, {pipeline_mode = #tpu.pipeline_mode<synchronous>, transform_indices = @transform_8, window_bounds = array<i64: 128, 128>}, {pipeline_mode = #tpu.pipeline_mode<synchronous>, transform_indices = @transform_9, window_bounds = array<i64: 1, 128>}, {transform_indices = @transform_10, window_bounds = array<i64: 1, 6, 128>}]} {
    %0 = tpu.iota {dimensions = array<i32: 1>} : vector<96x56xi32>
    %c0 = arith.constant 0 : index
    %c0_0 = arith.constant 0 : index
    %1 = vector.load %arg1[%c0, %c0_0] : memref<96x1xi32, #tpu.memory_space<vmem>>, vector<96x1xi32>
    %2 = vector.broadcast %1 : vector<96x1xi32> to vector<96x56xi32>
    %3 = arith.cmpi eq, %2, %0 : vector<96x56xi32>
    %4 = arith.extui %3 : vector<96x56xi1> to vector<96x56xi32>
    %5 = arith.sitofp %4 : vector<96x56xi32> to vector<96x56xf32>
    %c0_1 = arith.constant 0 : index
    %c0_2 = arith.constant 0 : index
    %6 = vector.load %arg2[%c0_1, %c0_2] : memref<56x32xf32, #tpu.memory_space<vmem>>, vector<56x32xf32>
    %cst = arith.constant dense<0.000000e+00> : vector<96x32xf32>
    %7 = tpu.matmul %5, %6, %cst {dimension_numbers = #tpu.dot_dimension_numbers<[1], [0], [0], [1], [0, 0, 1, 1], [], []>} : vector<96x56xf32>, vector<56x32xf32>, vector<96x32xf32> -> vector<96x32xf32>
    %c95_i32 = arith.constant 95 : i32
    %8 = tpu.dynamic_rotate %7 by %c95_i32 dim 0 : vector<96x32xf32>, i32 -> vector<96x32xf32>
    %c94_i32 = arith.constant 94 : i32
    %9 = tpu.dynamic_rotate %7 by %c94_i32 dim 0 : vector<96x32xf32>, i32 -> vector<96x32xf32>
    %10 = tpu.concatenate %7, %8, %9 in 1 : vector<96x32xf32>, vector<96x32xf32>, vector<96x32xf32> -> vector<96x96xf32>
    %c0_3 = arith.constant 0 : index
    %c0_4 = arith.constant 0 : index
    %11 = vector.load %arg3[%c0_3, %c0_4] : memref<96x128xf32, #tpu.memory_space<vmem>>, vector<96x128xf32>
    %cst_5 = arith.constant dense<0.000000e+00> : vector<96x128xf32>
    %12 = tpu.matmul %10, %11, %cst_5 {dimension_numbers = #tpu.dot_dimension_numbers<[1], [0], [0], [1], [0, 0, 1, 1], [], []>} : vector<96x96xf32>, vector<96x128xf32>, vector<96x128xf32> -> vector<96x128xf32>
    %c0_6 = arith.constant 0 : index
    %c0_7 = arith.constant 0 : index
    %13 = vector.load %arg4[%c0_6, %c0_7] : memref<1x128xf32, #tpu.memory_space<vmem>>, vector<1x128xf32>
    %14 = vector.broadcast %13 : vector<1x128xf32> to vector<96x128xf32>
    %15 = arith.addf %12, %14 : vector<96x128xf32>
    %cst_8 = arith.constant 0.000000e+00 : f32
    %16 = vector.broadcast %cst_8 : f32 to vector<96x128xf32>
    %17 = arith.maximumf %15, %16 : vector<96x128xf32>
    %18 = vector.shape_cast %17 : vector<96x128xf32> to vector<6x16x128xf32>
    %19 = tpu.iota {dimensions = array<i32: 1>} : vector<6x16x128xi32>
    %20 = tpu.iota {dimensions = array<i32: 2>} : vector<1x1x128xi32>
    %c0_i32 = arith.constant 0 : i32
    %21 = vector.broadcast %c0_i32 : i32 to vector<1x1x128xi32>
    %c0_i32_9 = arith.constant 0 : i32
    %22 = vector.broadcast %c0_i32_9 : i32 to vector<1x1x128xi32>
    %23 = arith.cmpi sge, %20, %22 : vector<1x1x128xi32>
    %c16_i32 = arith.constant 16 : i32
    %24 = vector.broadcast %c16_i32 : i32 to vector<1x1x128xi32>
    %25 = arith.cmpi slt, %20, %24 : vector<1x1x128xi32>
    %26 = arith.andi %23, %25 : vector<1x1x128xi1>
    %c15_i32 = arith.constant 15 : i32
    %27 = vector.broadcast %c15_i32 : i32 to vector<1x1x128xi32>
    %28 = arith.select %26, %27, %21 : vector<1x1x128xi1>, vector<1x1x128xi32>
    %c16_i32_10 = arith.constant 16 : i32
    %29 = vector.broadcast %c16_i32_10 : i32 to vector<1x1x128xi32>
    %30 = arith.cmpi sge, %20, %29 : vector<1x1x128xi32>
    %c32_i32 = arith.constant 32 : i32
    %31 = vector.broadcast %c32_i32 : i32 to vector<1x1x128xi32>
    %32 = arith.cmpi slt, %20, %31 : vector<1x1x128xi32>
    %33 = arith.andi %30, %32 : vector<1x1x128xi1>
    %c14_i32 = arith.constant 14 : i32
    %34 = vector.broadcast %c14_i32 : i32 to vector<1x1x128xi32>
    %35 = arith.select %33, %34, %28 : vector<1x1x128xi1>, vector<1x1x128xi32>
    %36 = vector.broadcast %35 : vector<1x1x128xi32> to vector<6x16x128xi32>
    %37 = arith.cmpi slt, %19, %36 : vector<6x16x128xi32>
    %cst_11 = arith.constant 0.000000e+00 : f32
    %38 = vector.broadcast %cst_11 : f32 to vector<6x16x128xf32>
    %39 = arith.select %37, %18, %38 : vector<6x16x128xi1>, vector<6x16x128xf32>
    %cst_12 = arith.constant dense<0xFF800000> : vector<6x128xf32>
    %40 = vector.multi_reduction <maximumf>, %39, %cst_12 [1] : vector<6x16x128xf32> to vector<6x128xf32>
    %c0_13 = arith.constant 0 : index
    %c0_14 = arith.constant 0 : index
    %41 = vector.load %arg5[%c0_13, %c0_14] : memref<128x256xf32, #tpu.memory_space<vmem>>, vector<128x256xf32>
    %cst_15 = arith.constant dense<0.000000e+00> : vector<6x256xf32>
    %42 = tpu.matmul %40, %41, %cst_15 {dimension_numbers = #tpu.dot_dimension_numbers<[1], [0], [0], [1], [0, 0, 1, 1], [], []>} : vector<6x128xf32>, vector<128x256xf32>, vector<6x256xf32> -> vector<6x256xf32>
    %c0_16 = arith.constant 0 : index
    %c0_17 = arith.constant 0 : index
    %43 = vector.load %arg6[%c0_16, %c0_17] : memref<1x256xf32, #tpu.memory_space<vmem>>, vector<1x256xf32>
    %44 = vector.broadcast %43 : vector<1x256xf32> to vector<6x256xf32>
    %45 = arith.addf %42, %44 : vector<6x256xf32>
    %46 = vector.extract_strided_slice %45 {offsets = [0, 0], sizes = [6, 128], strides = [1, 1]} : vector<6x256xf32> to vector<6x128xf32>
    %cst_18 = arith.constant 0.000000e+00 : f32
    %47 = vector.broadcast %cst_18 : f32 to vector<6x128xf32>
    %48 = arith.maximumf %46, %47 : vector<6x128xf32>
    %49 = vector.extract_strided_slice %45 {offsets = [0, 128], sizes = [6, 128], strides = [1, 1]} : vector<6x256xf32> to vector<6x128xf32>
    %50 = arith.negf %49 : vector<6x128xf32>
    %51 = math.exp %50 : vector<6x128xf32>
    %cst_19 = arith.constant 1.000000e+00 : f32
    %52 = vector.broadcast %cst_19 : f32 to vector<6x128xf32>
    %53 = arith.addf %52, %51 : vector<6x128xf32>
    %54 = arith.divf %52, %53 : vector<6x128xf32>
    %55 = arith.subf %48, %40 : vector<6x128xf32>
    %56 = arith.mulf %54, %55 : vector<6x128xf32>
    %57 = arith.addf %40, %56 : vector<6x128xf32>
    %58 = tpu.iota {dimensions = array<i32: 1>} : vector<1x128xi32>
    %c32_i32_20 = arith.constant 32 : i32
    %59 = vector.broadcast %c32_i32_20 : i32 to vector<1x128xi32>
    %60 = arith.cmpi slt, %58, %59 : vector<1x128xi32>
    %cst_21 = arith.constant dense<0.000000e+00> : vector<6xf32>
    %61 = vector.multi_reduction <add>, %57, %cst_21 [1] : vector<6x128xf32> to vector<6xf32>
    %62 = vector.shape_cast %61 : vector<6xf32> to vector<6x1xf32>
    %cst_22 = arith.constant 3.125000e-02 : f32
    %63 = vector.broadcast %cst_22 : f32 to vector<6x1xf32>
    %64 = arith.mulf %62, %63 : vector<6x1xf32>
    %65 = vector.broadcast %64 : vector<6x1xf32> to vector<6x128xf32>
    %66 = arith.subf %57, %65 : vector<6x128xf32>
    %cst_23 = arith.constant 0.000000e+00 : f32
    %67 = vector.shape_cast %60 : vector<1x128xi1> to vector<1x128xi1>
    %68 = vector.broadcast %67 : vector<1x128xi1> to vector<6x128xi1>
    %69 = vector.broadcast %cst_23 : f32 to vector<6x128xf32>
    %70 = arith.select %68, %66, %69 : vector<6x128xi1>, vector<6x128xf32>
    %71 = arith.mulf %70, %70 : vector<6x128xf32>
    %cst_24 = arith.constant dense<0.000000e+00> : vector<6xf32>
    %72 = vector.multi_reduction <add>, %71, %cst_24 [1] : vector<6x128xf32> to vector<6xf32>
    %73 = vector.shape_cast %72 : vector<6xf32> to vector<6x1xf32>
    %cst_25 = arith.constant 3.125000e-02 : f32
    %74 = vector.broadcast %cst_25 : f32 to vector<6x1xf32>
    %75 = arith.mulf %73, %74 : vector<6x1xf32>
    %76 = vector.broadcast %64 : vector<6x1xf32> to vector<6x128xf32>
    %77 = arith.subf %57, %76 : vector<6x128xf32>
    %cst_26 = arith.constant 9.99999974E-6 : f32
    %78 = vector.broadcast %cst_26 : f32 to vector<6x1xf32>
    %79 = arith.addf %75, %78 : vector<6x1xf32>
    %80 = math.rsqrt %79 : vector<6x1xf32>
    %81 = vector.broadcast %80 : vector<6x1xf32> to vector<6x128xf32>
    %82 = arith.mulf %77, %81 : vector<6x128xf32>
    %c0_27 = arith.constant 0 : index
    %c0_28 = arith.constant 0 : index
    %83 = vector.load %arg7[%c0_27, %c0_28] : memref<1x128xf32, #tpu.memory_space<vmem>>, vector<1x128xf32>
    %84 = vector.broadcast %83 : vector<1x128xf32> to vector<6x128xf32>
    %85 = arith.mulf %82, %84 : vector<6x128xf32>
    %c0_29 = arith.constant 0 : index
    %c0_30 = arith.constant 0 : index
    %86 = vector.load %arg8[%c0_29, %c0_30] : memref<1x128xf32, #tpu.memory_space<vmem>>, vector<1x128xf32>
    %87 = vector.broadcast %86 : vector<1x128xf32> to vector<6x128xf32>
    %88 = arith.addf %85, %87 : vector<6x128xf32>
    %c0_31 = arith.constant 0 : index
    %c0_32 = arith.constant 0 : index
    %89 = vector.load %arg9[%c0_31, %c0_32] : memref<128x128xf32, #tpu.memory_space<vmem>>, vector<128x128xf32>
    %cst_33 = arith.constant dense<0.000000e+00> : vector<6x128xf32>
    %90 = tpu.matmul %88, %89, %cst_33 {dimension_numbers = #tpu.dot_dimension_numbers<[1], [0], [0], [1], [0, 0, 1, 1], [], []>} : vector<6x128xf32>, vector<128x128xf32>, vector<6x128xf32> -> vector<6x128xf32>
    %c0_34 = arith.constant 0 : index
    %c0_35 = arith.constant 0 : index
    %91 = vector.load %arg10[%c0_34, %c0_35] : memref<1x128xf32, #tpu.memory_space<vmem>>, vector<1x128xf32>
    %92 = vector.broadcast %91 : vector<1x128xf32> to vector<6x128xf32>
    %93 = arith.addf %90, %92 : vector<6x128xf32>
    %94 = vector.shape_cast %93 : vector<6x128xf32> to vector<1x6x128xf32>
    %c0_36 = arith.constant 0 : index
    %c0_37 = arith.constant 0 : index
    %c0_38 = arith.constant 0 : index
    %95 = vector.load %arg11[%c0_36, %c0_37, %c0_38] : memref<1x6x128xf32, #tpu.memory_space<vmem>>, vector<1x6x128xf32>
    tpu.vector_store %arg11[%c0_36, %c0_37, %c0_38], %94 {strides = array<i32>} : memref<1x6x128xf32, #tpu.memory_space<vmem>>, vector<1x6x128xf32>,
    return
  }
  func.func @transform_0(%arg0: i32) -> (i32, i32) {
    %c0_i32 = arith.constant 0 : i32
    %c0_i32_0 = arith.constant 0 : i32
    return %arg0, %c0_i32 : i32, i32
  }
  func.func @transform_1(%arg0: i32) -> (i32, i32) {
    %c0_i32 = arith.constant 0 : i32
    %c0_i32_0 = arith.constant 0 : i32
    %c0_i32_1 = arith.constant 0 : i32
    return %c0_i32, %c0_i32_0 : i32, i32
  }
  func.func @transform_2(%arg0: i32) -> (i32, i32) {
    %c0_i32 = arith.constant 0 : i32
    %c0_i32_0 = arith.constant 0 : i32
    %c0_i32_1 = arith.constant 0 : i32
    return %c0_i32, %c0_i32_0 : i32, i32
  }
  func.func @transform_3(%arg0: i32) -> (i32, i32) {
    %c0_i32 = arith.constant 0 : i32
    %c0_i32_0 = arith.constant 0 : i32
    %c0_i32_1 = arith.constant 0 : i32
    return %c0_i32, %c0_i32_0 : i32, i32
  }
  func.func @transform_4(%arg0: i32) -> (i32, i32) {
    %c0_i32 = arith.constant 0 : i32
    %c0_i32_0 = arith.constant 0 : i32
    %c0_i32_1 = arith.constant 0 : i32
    return %c0_i32, %c0_i32_0 : i32, i32
  }
  func.func @transform_5(%arg0: i32) -> (i32, i32) {
    %c0_i32 = arith.constant 0 : i32
    %c0_i32_0 = arith.constant 0 : i32
    %c0_i32_1 = arith.constant 0 : i32
    return %c0_i32, %c0_i32_0 : i32, i32
  }
  func.func @transform_6(%arg0: i32) -> (i32, i32) {
    %c0_i32 = arith.constant 0 : i32
    %c0_i32_0 = arith.constant 0 : i32
    %c0_i32_1 = arith.constant 0 : i32
    return %c0_i32, %c0_i32_0 : i32, i32
  }
  func.func @transform_7(%arg0: i32) -> (i32, i32) {
    %c0_i32 = arith.constant 0 : i32
    %c0_i32_0 = arith.constant 0 : i32
    %c0_i32_1 = arith.constant 0 : i32
    return %c0_i32, %c0_i32_0 : i32, i32
  }
  func.func @transform_8(%arg0: i32) -> (i32, i32) {
    %c0_i32 = arith.constant 0 : i32
    %c0_i32_0 = arith.constant 0 : i32
    %c0_i32_1 = arith.constant 0 : i32
    return %c0_i32, %c0_i32_0 : i32, i32
  }
  func.func @transform_9(%arg0: i32) -> (i32, i32) {
    %c0_i32 = arith.constant 0 : i32
    %c0_i32_0 = arith.constant 0 : i32
    %c0_i32_1 = arith.constant 0 : i32
    return %c0_i32, %c0_i32_0 : i32, i32
  }
  func.func @transform_10(%arg0: i32) -> (i32, i32, i32) {
    %c0_i32 = arith.constant 0 : i32
    %c0_i32_0 = arith.constant 0 : i32
    %c0_i32_1 = arith.constant 0 : i32
    return %arg0, %c0_i32, %c0_i32_0 : i32, i32, i32
  }
}

</mosaic_0001>

<llo_original>
// kernel: tpu_custom_call.1
$region0: #{tpu_custom_call.1}
  #allocation0 [shape = 'u32[]', space=smem, size = 0x4, offset = 0x4, fixed_abs, tag = 'smem constant byte address 0x4 - core index']
  #allocation1 [shape = 'u32[144,128]{1,0:T(1,128)}', space=vmem, size = 0x12000, scoped, tag = 'internal scratch']
  %s0 = inlined_call_operand.vmem [shape: s32[96,1], index: 0, kind: input, shape index: {}]
  %s1 = inlined_call_operand.vmem [shape: f32[56,32], index: 1, kind: input, shape index: {}]
  %s2 = inlined_call_operand.hbm [shape: f32[96,128], index: 2, kind: input, shape index: {}]
  %s3 = inlined_call_operand.vmem [shape: f32[1,128], index: 3, kind: input, shape index: {}]
  %s4 = inlined_call_operand.hbm [shape: f32[128,256], index: 4, kind: input, shape index: {}]
  %s5 = inlined_call_operand.vmem [shape: f32[1,256], index: 5, kind: input, shape index: {}]
  %s6 = inlined_call_operand.vmem [shape: f32[1,128], index: 6, kind: input, shape index: {}]
  %s7 = inlined_call_operand.vmem [shape: f32[1,128], index: 7, kind: input, shape index: {}]
  %s8 = inlined_call_operand.vmem [shape: f32[128,128], index: 8, kind: input, shape index: {}]
  %s9 = inlined_call_operand.vmem [shape: f32[1,128], index: 9, kind: input, shape index: {}]
  %s10 = inlined_call_operand.vmem [shape: f32[1,6,128], index: 10, kind: output, shape index: {}]
  %s11 = sld [smem:[#allocation0]]
  $region58: #{tpu_custom_call.1} parent=0
    _
  %s13 = ssub.s32 1, %s11
  %s14 = scalar_select 0, %s13, %s11
  $region1: #{tpu_custom_call.1} parent=0
    #allocation2 [shape = 'u8[49152]{0}', space=vmem, size = 0xc000, scoped, tag = 'input window, operand 2, single buffered']
    #allocation3 [shape = 's32[1]{0}', space=sflag, size = 0x4, scoped, tag = 'scoped memory for tpu_custom_call.1']
    #allocation4 [shape = 'u8[131072]{0}', space=vmem, size = 0x20000, scoped, tag = 'input window, operand 4, single buffered']
    #allocation5 [shape = 's32[1]{0}', space=sflag, size = 0x4, scoped, tag = 'scoped memory for tpu_custom_call.1']
    %15 = vsyncpa [#allocation3], 0
    %16 = vsyncpa [#allocation5], 0
    // Predicated region
    $region2: #{tpu_custom_call.1} parent=1 // pred_check
      _
    $region3: #{tpu_custom_call.1} parent=1 // pred_check_branch
      %18 = sbr.rel (0) target = $region5
    $region4: #{tpu_custom_call.1} parent=1 // pred_region
      _
    $region5: #{tpu_custom_call.1} parent=1 // pred_fallthru
      _
    // Predicated region
    $region6: #{tpu_custom_call.1} parent=1 // pred_check
      _
    $region7: #{tpu_custom_call.1} parent=1 // pred_check_branch
      %20 = sbr.rel (0) target = $region9
    $region8: #{tpu_custom_call.1} parent=1 // pred_region
      _
    $region9: #{tpu_custom_call.1} parent=1 // pred_fallthru
      _
    // Predicated region
    $region10: #{tpu_custom_call.1} parent=1 // pred_check
      _
    $region11: #{tpu_custom_call.1} parent=1 // pred_check_branch
      %22 = sbr.rel (0) target = $region13
    $region12: #{tpu_custom_call.1} parent=1 // pred_region
      %s24 = ssub.s32 1536, 1536
      %25 = vsyncadd [#allocation3], %s24
      %s26 = sshll.u32 [#allocation2], 4
      %s27 = int_to_ptr.vmem [resolvable:$true] %s26
      %32 = dma.hbm_to_vmem [thread:$0]  %s2, 1536, %s27, [#allocation3], 128, 128, 8
    $region13: #{tpu_custom_call.1} parent=1 // pred_fallthru
      _
    // Predicated region
    $region14: #{tpu_custom_call.1} parent=1 // pred_check
      _
    $region15: #{tpu_custom_call.1} parent=1 // pred_check_branch
      %34 = sbr.rel (0) target = $region17
    $region16: #{tpu_custom_call.1} parent=1 // pred_region
      _
    $region17: #{tpu_custom_call.1} parent=1 // pred_fallthru
      _
    // Predicated region
    $region18: #{tpu_custom_call.1} parent=1 // pred_check
      _
    $region19: #{tpu_custom_call.1} parent=1 // pred_check_branch
      %36 = sbr.rel (0) target = $region21
    $region20: #{tpu_custom_call.1} parent=1 // pred_region
      %s38 = ssub.s32 4096, 4096
      %39 = vsyncadd [#allocation5], %s38
      %s40 = sshll.u32 [#allocation4], 4
      %s41 = int_to_ptr.vmem [resolvable:$true] %s40
      %46 = dma.hbm_to_vmem [thread:$0]  %s4, 4096, %s41, [#allocation5], 256, 256, 16
    $region21: #{tpu_custom_call.1} parent=1 // pred_fallthru
      _
    // Predicated region
    $region22: #{tpu_custom_call.1} parent=1 // pred_check
      _
    $region23: #{tpu_custom_call.1} parent=1 // pred_check_branch
      %48 = sbr.rel (0) target = $region25
    $region24: #{tpu_custom_call.1} parent=1 // pred_region
      _
    $region25: #{tpu_custom_call.1} parent=1 // pred_fallthru
      _
    // Predicated region
    $region26: #{tpu_custom_call.1} parent=1 // pred_check
      _
    $region27: #{tpu_custom_call.1} parent=1 // pred_check_branch
      %50 = sbr.rel (0) target = $region29
    $region28: #{tpu_custom_call.1} parent=1 // pred_region
      _
    $region29: #{tpu_custom_call.1} parent=1 // pred_fallthru
      _
    // Predicated region
    $region30: #{tpu_custom_call.1} parent=1 // pred_check
      _
    $region31: #{tpu_custom_call.1} parent=1 // pred_check_branch
      %52 = sbr.rel (0) target = $region33
    $region32: #{tpu_custom_call.1} parent=1 // pred_region
      _
    $region33: #{tpu_custom_call.1} parent=1 // pred_fallthru
      _
    // Predicated region
    $region34: #{tpu_custom_call.1} parent=1 // pred_check
      _
    $region35: #{tpu_custom_call.1} parent=1 // pred_check_branch
      %54 = sbr.rel (0) target = $region37
    $region36: #{tpu_custom_call.1} parent=1 // pred_region
      _
    $region37: #{tpu_custom_call.1} parent=1 // pred_fallthru
      _
    // Predicated region
    $region38: #{tpu_custom_call.1} parent=1 // pred_check
      _
    $region39: #{tpu_custom_call.1} parent=1 // pred_check_branch
      %56 = sbr.rel (0) target = $region41
    $region40: #{tpu_custom_call.1} parent=1 // pred_region
      _
    $region41: #{tpu_custom_call.1} parent=1 // pred_fallthru
      _
    // Predicated region
    $region42: #{tpu_custom_call.1} parent=1 // pred_check
      _
    $region43: #{tpu_custom_call.1} parent=1 // pred_check_branch
      %58 = sbr.rel (0) target = $region45
    $region44: #{tpu_custom_call.1} parent=1 // pred_region
      %59 = dma.done [#allocation3], 1536
    $region45: #{tpu_custom_call.1} parent=1 // pred_fallthru
      _
    // Predicated region
    $region46: #{tpu_custom_call.1} parent=1 // pred_check
      _
    $region47: #{tpu_custom_call.1} parent=1 // pred_check_branch
      %61 = sbr.rel (0) target = $region49
    $region48: #{tpu_custom_call.1} parent=1 // pred_region
      %62 = dma.done [#allocation5], 4096
    $region49: #{tpu_custom_call.1} parent=1 // pred_fallthru
      _
    %v63 = vlaneseq
    %v64 = vand.u32 %v63, 127
    %v65 = vld [vmem:[%s0] sm:$0xff]
    %v66 = vld [vmem:[%s0 + $0x8] sm:$0xff]
    %v67 = vld [vmem:[%s0 + $0x10] sm:$0xff]
    %v68 = vld [vmem:[%s0 + $0x18] sm:$0xff]
    %v69 = vld [vmem:[%s0 + $0x20] sm:$0xff]
    %v70 = vld [vmem:[%s0 + $0x28] sm:$0xff]
    %v71 = vld [vmem:[%s0 + $0x30] sm:$0xff]
    %v72 = vld [vmem:[%s0 + $0x38] sm:$0xff]
    %v73 = vld [vmem:[%s0 + $0x40] sm:$0xff]
    %v74 = vld [vmem:[%s0 + $0x48] sm:$0xff]
    %v75 = vld [vmem:[%s0 + $0x50] sm:$0xff]
    %v76 = vld [vmem:[%s0 + $0x58] sm:$0xff]
    %77 = vset.pattern.permute.xlu0 0
    %78 = vperm.xlu0 %77, %v65
    %v79 = vpop.permute.xlu0 %78
    %80 = vset.pattern.permute.xlu0 0
    %81 = vperm.xlu0 %80, %v66
    %v82 = vpop.permute.xlu0 %81
    %83 = vset.pattern.permute.xlu0 0
    %84 = vperm.xlu0 %83, %v67
    %v85 = vpop.permute.xlu0 %84
    %86 = vset.pattern.permute.xlu0 0
    %87 = vperm.xlu0 %86, %v68
    %v88 = vpop.permute.xlu0 %87
    %89 = vset.pattern.permute.xlu0 0
    %90 = vperm.xlu0 %89, %v69
    %v91 = vpop.permute.xlu0 %90
    %92 = vset.pattern.permute.xlu0 0
    %93 = vperm.xlu0 %92, %v70
    %v94 = vpop.permute.xlu0 %93
    %95 = vset.pattern.permute.xlu0 0
    %96 = vperm.xlu0 %95, %v71
    %v97 = vpop.permute.xlu0 %96
    %98 = vset.pattern.permute.xlu0 0
    %99 = vperm.xlu0 %98, %v72
    %v100 = vpop.permute.xlu0 %99
    %101 = vset.pattern.permute.xlu0 0
    %102 = vperm.xlu0 %101, %v73
    %v103 = vpop.permute.xlu0 %102
    %104 = vset.pattern.permute.xlu0 0
    %105 = vperm.xlu0 %104, %v74
    %v106 = vpop.permute.xlu0 %105
    %107 = vset.pattern.permute.xlu0 0
    %108 = vperm.xlu0 %107, %v75
    %v109 = vpop.permute.xlu0 %108
    %110 = vset.pattern.permute.xlu0 0
    %111 = vperm.xlu0 %110, %v76
    %v112 = vpop.permute.xlu0 %111
    %vm113 = vcmp.eq.s32.totalorder %v79, %v64
    %vm114 = vcmp.eq.s32.totalorder %v82, %v64
    %vm115 = vcmp.eq.s32.totalorder %v85, %v64
    %vm116 = vcmp.eq.s32.totalorder %v88, %v64
    %vm117 = vcmp.eq.s32.totalorder %v91, %v64
    %vm118 = vcmp.eq.s32.totalorder %v94, %v64
    %vm119 = vcmp.eq.s32.totalorder %v97, %v64
    %vm120 = vcmp.eq.s32.totalorder %v100, %v64
    %vm121 = vcmp.eq.s32.totalorder %v103, %v64
    %vm122 = vcmp.eq.s32.totalorder %v106, %v64
    %vm123 = vcmp.eq.s32.totalorder %v109, %v64
    %vm124 = vcmp.eq.s32.totalorder %v112, %v64
    %v125 = vsel %vm113, 1, 0
    %v126 = vsel %vm114, 1, 0
    %v127 = vsel %vm115, 1, 0
    %v128 = vsel %vm116, 1, 0
    %v129 = vsel %vm117, 1, 0
    %v130 = vsel %vm118, 1, 0
    %v131 = vsel %vm119, 1, 0
    %v132 = vsel %vm120, 1, 0
    %v133 = vsel %vm121, 1, 0
    %v134 = vsel %vm122, 1, 0
    %v135 = vsel %vm123, 1, 0
    %v136 = vsel %vm124, 1, 0
    %v137 = vcvt.s32.f32 %v125
    %v138 = vcvt.s32.f32 %v126
    %v139 = vcvt.s32.f32 %v127
    %v140 = vcvt.s32.f32 %v128
    %v141 = vcvt.s32.f32 %v129
    %v142 = vcvt.s32.f32 %v130
    %v143 = vcvt.s32.f32 %v131
    %v144 = vcvt.s32.f32 %v132
    %v145 = vcvt.s32.f32 %v133
    %v146 = vcvt.s32.f32 %v134
    %v147 = vcvt.s32.f32 %v135
    %v148 = vcvt.s32.f32 %v136
    %v149 = vld [vmem:[%s1] sm:$0xff]
    %v150 = vld [vmem:[%s1 + $0x8] sm:$0xff]
    %v151 = vld [vmem:[%s1 + $0x10] sm:$0xff]
    %v152 = vld [vmem:[%s1 + $0x18] sm:$0xff]
    %v153 = vld [vmem:[%s1 + $0x20] sm:$0xff]
    %v154 = vld [vmem:[%s1 + $0x28] sm:$0xff]
    %v155 = vld [vmem:[%s1 + $0x30] sm:$0xff]
    %vm156 = vcmask 457728
    %v158 = vsel %vm156, %v137, 0
    %v161 = vsel %vm156, %v138, 0
    %v164 = vsel %vm156, %v139, 0
    %v167 = vsel %vm156, %v140, 0
    %v170 = vsel %vm156, %v141, 0
    %v173 = vsel %vm156, %v142, 0
    %v176 = vsel %vm156, %v143, 0
    %v179 = vsel %vm156, %v144, 0
    %v182 = vsel %vm156, %v145, 0
    %v185 = vsel %vm156, %v146, 0
    %v188 = vsel %vm156, %v147, 0
    %v191 = vsel %vm156, %v148, 0
    %193 = vmatprep.subr.mxu0 0.0
    %194 = vmatpush1.msra.mxu0 %v149
    %195 = vmatprep.subr.mxu0 0.0
    %196 = vmatpush1.msra.mxu0 %v150
    %197 = vmatprep.subr.mxu0 0.0
    %198 = vmatpush1.msra.mxu0 %v151
    %199 = vmatprep.subr.mxu0 0.0
    %200 = vmatpush1.msra.mxu0 %v152
    %201 = vmatprep.subr.mxu0 0.0
    %202 = vmatpush1.msra.mxu0 %v153
    %203 = vmatprep.subr.mxu0 0.0
    %204 = vmatpush1.msra.mxu0 %v154
    %205 = vmatprep.subr.mxu0 0.0
    %206 = vmatpush1.msra.mxu0 %v155
    %207 = vmatprep.subr.mxu0 0.0
    %208 = vmatpush1.msra.mxu0 0.0
    %209 = vmatprep.subr.mxu0 0.0
    %210 = vmatpush1.msra.mxu0 0.0
    %211 = vmatprep.subr.mxu0 0.0
    %212 = vmatpush1.msra.mxu0 0.0
    %213 = vmatprep.subr.mxu0 0.0
    %214 = vmatpush1.msra.mxu0 0.0
    %215 = vmatprep.subr.mxu0 0.0
    %216 = vmatpush1.msra.mxu0 0.0
    %217 = vmatprep.subr.mxu0 0.0
    %218 = vmatpush1.msra.mxu0 0.0
    %219 = vmatprep.subr.mxu0 0.0
    %220 = vmatpush1.msra.mxu0 0.0
    %221 = vmatprep.subr.mxu0 0.0
    %222 = vmatpush1.msra.mxu0 0.0
    %223 = vmatprep.subr.mxu0 0.0
    %224 = vmatpush1.msra.mxu0 0.0
    %225 = vmatprep.subr.mxu0 0.0
    %226 = vmatpush1.msra.mxu0 0.0
    %227 = vmatprep.subr.mxu0 0.0
    %228 = vmatpush1.msra.mxu0 0.0
    %229 = vmatprep.subr.mxu0 0.0
    %230 = vmatpush1.msra.mxu0 0.0
    %231 = vmatprep.subr.mxu0 0.0
    %232 = vmatpush1.msra.mxu0 0.0
    %233 = vmatprep.subr.mxu0 0.0
    %234 = vmatpush1.msra.mxu0 0.0
    %235 = vmatprep.subr.mxu0 0.0
    %236 = vmatpush1.msra.mxu0 0.0
    %237 = vmatprep.subr.mxu0 0.0
    %238 = vmatpush1.msra.mxu0 0.0
    %239 = vmatprep.subr.mxu0 0.0
    %240 = vmatpush1.msra.mxu0 0.0
    %241 = vmatprep.subr.mxu0 0.0
    %242 = vmatpush1.msra.mxu0 0.0
    %243 = vmatprep.subr.mxu0 0.0
    %244 = vmatpush1.msra.mxu0 0.0
    %245 = vmatprep.subr.mxu0 0.0
    %246 = vmatpush1.msra.mxu0 0.0
    %247 = vmatprep.subr.mxu0 0.0
    %248 = vmatpush1.msra.mxu0 0.0
    %249 = vmatprep.subr.mxu0 0.0
    %250 = vmatpush1.msra.mxu0 0.0
    %251 = vmatprep.subr.mxu0 0.0
    %252 = vmatpush1.msra.mxu0 0.0
    %253 = vmatprep.subr.mxu0 0.0
    %254 = vmatpush1.msra.mxu0 0.0
    %255 = vmatprep.subr.mxu0 0.0
    %256 = vmatpush1.msra.mxu0 0.0
    %257 = vmatprep.mubr.f32.mxu0 0.0
    %258 = vmatmul.mubr.f32.gmra.mrb[0].mxu0 %v158
    %v259 = vpop.f32.mrb[0].mxu0
    %v260 = vadd.f32 0.0, %v259
    %v261 = vpop.f32.mrb[0].mxu0
    %262 = vmatprep.mubr.f32.mxu0 0.0
    %263 = vmatmul.mubr.f32.gmra.mrb[0].mxu0 %v161
    %v264 = vpop.f32.mrb[0].mxu0
    %v265 = vadd.f32 0.0, %v264
    %v266 = vpop.f32.mrb[0].mxu0
    %267 = vmatprep.mubr.f32.mxu0 0.0
    %268 = vmatmul.mubr.f32.gmra.mrb[0].mxu0 %v164
    %v269 = vpop.f32.mrb[0].mxu0
    %v270 = vadd.f32 0.0, %v269
    %v271 = vpop.f32.mrb[0].mxu0
    %272 = vmatprep.mubr.f32.mxu0 0.0
    %273 = vmatmul.mubr.f32.gmra.mrb[0].mxu0 %v167
    %v274 = vpop.f32.mrb[0].mxu0
    %v275 = vadd.f32 0.0, %v274
    %v276 = vpop.f32.mrb[0].mxu0
    %277 = vmatprep.mubr.f32.mxu0 0.0
    %278 = vmatmul.mubr.f32.gmra.mrb[0].mxu0 %v170
    %v279 = vpop.f32.mrb[0].mxu0
    %v280 = vadd.f32 0.0, %v279
    %v281 = vpop.f32.mrb[0].mxu0
    %282 = vmatprep.mubr.f32.mxu0 0.0
    %283 = vmatmul.mubr.f32.gmra.mrb[0].mxu0 %v173
    %v284 = vpop.f32.mrb[0].mxu0
    %v285 = vadd.f32 0.0, %v284
    %v286 = vpop.f32.mrb[0].mxu0
    %287 = vmatprep.mubr.f32.mxu0 0.0
    %288 = vmatmul.mubr.f32.gmra.mrb[0].mxu0 %v176
    %v289 = vpop.f32.mrb[0].mxu0
    %v290 = vadd.f32 0.0, %v289
    %v291 = vpop.f32.mrb[0].mxu0
    %292 = vmatprep.mubr.f32.mxu0 0.0
    %293 = vmatmul.mubr.f32.gmra.mrb[0].mxu0 %v179
    %v294 = vpop.f32.mrb[0].mxu0
    %v295 = vadd.f32 0.0, %v294
    %v296 = vpop.f32.mrb[0].mxu0
    %297 = vmatprep.mubr.f32.mxu0 0.0
    %298 = vmatmul.mubr.f32.gmra.mrb[0].mxu0 %v182
    %v299 = vpop.f32.mrb[0].mxu0
    %v300 = vadd.f32 0.0, %v299
    %v301 = vpop.f32.mrb[0].mxu0
    %302 = vmatprep.mubr.f32.mxu0 0.0
    %303 = vmatmul.mubr.f32.gmra.mrb[0].mxu0 %v185
    %v304 = vpop.f32.mrb[0].mxu0
    %v305 = vadd.f32 0.0, %v304
    %v306 = vpop.f32.mrb[0].mxu0
    %307 = vmatprep.mubr.f32.mxu0 0.0
    %308 = vmatmul.mubr.f32.gmra.mrb[0].mxu0 %v188
    %v309 = vpop.f32.mrb[0].mxu0
    %v310 = vadd.f32 0.0, %v309
    %v311 = vpop.f32.mrb[0].mxu0
    %312 = vmatprep.mubr.f32.mxu0 0.0
    %313 = vmatmul.mubr.f32.gmra.mrb[0].mxu0 %v191
    %v314 = vpop.f32.mrb[0].mxu0
    %v315 = vadd.f32 0.0, %v314
    %v316 = vpop.f32.mrb[0].mxu0
    %317 = vdwg.mxu0
    %v318 = vrot.slane %v260, 1
    %v319 = vrot.slane %v265, 1
    %v320 = vrot.slane %v270, 1
    %v321 = vrot.slane %v275, 1
    %v322 = vrot.slane %v280, 1
    %v323 = vrot.slane %v285, 1
    %v324 = vrot.slane %v290, 1
    %v325 = vrot.slane %v295, 1
    %v326 = vrot.slane %v300, 1
    %v327 = vrot.slane %v305, 1
    %v328 = vrot.slane %v310, 1
    %v329 = vrot.slane %v315, 1
    %v330 = vlaneseq
    %v331 = vshrl.u32 %v330, 7
    %vm332 = vcmp.lt.s32.totalorder %v331, 7
    %v333 = vsel %vm332, %v328, %v329
    %v334 = vsel %vm332, %v327, %v328
    %v335 = vsel %vm332, %v326, %v327
    %v336 = vsel %vm332, %v325, %v326
    %v337 = vsel %vm332, %v324, %v325
    %v338 = vsel %vm332, %v323, %v324
    %v339 = vsel %vm332, %v322, %v323
    %v340 = vsel %vm332, %v321, %v322
    %v341 = vsel %vm332, %v320, %v321
    %v342 = vsel %vm332, %v319, %v320
    %v343 = vsel %vm332, %v318, %v319
    %v344 = vsel %vm332, %v329, %v318
    %v345 = vrot.slane %v260, 2
    %v346 = vrot.slane %v265, 2
    %v347 = vrot.slane %v270, 2
    %v348 = vrot.slane %v275, 2
    %v349 = vrot.slane %v280, 2
    %v350 = vrot.slane %v285, 2
    %v351 = vrot.slane %v290, 2
    %v352 = vrot.slane %v295, 2
    %v353 = vrot.slane %v300, 2
    %v354 = vrot.slane %v305, 2
    %v355 = vrot.slane %v310, 2
    %v356 = vrot.slane %v315, 2
    %vm357 = vcmp.lt.s32.totalorder %v331, 6
    %v358 = vsel %vm357, %v355, %v356
    %v359 = vsel %vm357, %v354, %v355
    %v360 = vsel %vm357, %v353, %v354
    %v361 = vsel %vm357, %v352, %v353
    %v362 = vsel %vm357, %v351, %v352
    %v363 = vsel %vm357, %v350, %v351
    %v364 = vsel %vm357, %v349, %v350
    %v365 = vsel %vm357, %v348, %v349
    %v366 = vsel %vm357, %v347, %v348
    %v367 = vsel %vm357, %v346, %v347
    %v368 = vsel %vm357, %v345, %v346
    %v369 = vsel %vm357, %v356, %v345
    %382 = vrot.lane.b32.xlu0 %v343, 32
    %v383 = vpop.permute.xlu0 %382
    %384 = vrot.lane.b32.xlu0 %v342, 32
    %v385 = vpop.permute.xlu0 %384
    %386 = vrot.lane.b32.xlu0 %v341, 32
    %v387 = vpop.permute.xlu0 %386
    %388 = vrot.lane.b32.xlu0 %v340, 32
    %v389 = vpop.permute.xlu0 %388
    %390 = vrot.lane.b32.xlu0 %v339, 32
    %v391 = vpop.permute.xlu0 %390
    %392 = vrot.lane.b32.xlu0 %v338, 32
    %v393 = vpop.permute.xlu0 %392
    %394 = vrot.lane.b32.xlu0 %v337, 32
    %v395 = vpop.permute.xlu0 %394
    %396 = vrot.lane.b32.xlu0 %v336, 32
    %v397 = vpop.permute.xlu0 %396
    %398 = vrot.lane.b32.xlu0 %v335, 32
    %v399 = vpop.permute.xlu0 %398
    %400 = vrot.lane.b32.xlu0 %v334, 32
    %v401 = vpop.permute.xlu0 %400
    %402 = vrot.lane.b32.xlu0 %v333, 32
    %v403 = vpop.permute.xlu0 %402
    %404 = vrot.lane.b32.xlu0 %v344, 32
    %v405 = vpop.permute.xlu0 %404
    %430 = vrot.lane.b32.xlu0 %v368, 64
    %v431 = vpop.permute.xlu0 %430
    %432 = vrot.lane.b32.xlu0 %v367, 64
    %v433 = vpop.permute.xlu0 %432
    %434 = vrot.lane.b32.xlu0 %v366, 64
    %v435 = vpop.permute.xlu0 %434
    %436 = vrot.lane.b32.xlu0 %v365, 64
    %v437 = vpop.permute.xlu0 %436
    %438 = vrot.lane.b32.xlu0 %v364, 64
    %v439 = vpop.permute.xlu0 %438
    %440 = vrot.lane.b32.xlu0 %v363, 64
    %v441 = vpop.permute.xlu0 %440
    %442 = vrot.lane.b32.xlu0 %v362, 64
    %v443 = vpop.permute.xlu0 %442
    %444 = vrot.lane.b32.xlu0 %v361, 64
    %v445 = vpop.permute.xlu0 %444
    %446 = vrot.lane.b32.xlu0 %v360, 64
    %v447 = vpop.permute.xlu0 %446
    %448 = vrot.lane.b32.xlu0 %v359, 64
    %v449 = vpop.permute.xlu0 %448
    %450 = vrot.lane.b32.xlu0 %v358, 64
    %v451 = vpop.permute.xlu0 %450
    %452 = vrot.lane.b32.xlu0 %v369, 64
    %v453 = vpop.permute.xlu0 %452
    %vm466 = vcmask 261120
    %v467 = vsel %vm466, %v260, %v383
    %v468 = vsel %vm466, %v265, %v385
    %v469 = vsel %vm466, %v270, %v387
    %v470 = vsel %vm466, %v275, %v389
    %v471 = vsel %vm466, %v280, %v391
    %v472 = vsel %vm466, %v285, %v393
    %v473 = vsel %vm466, %v290, %v395
    %v474 = vsel %vm466, %v295, %v397
    %v475 = vsel %vm466, %v300, %v399
    %v476 = vsel %vm466, %v305, %v401
    %v477 = vsel %vm466, %v310, %v403
    %v478 = vsel %vm466, %v315, %v405
    %vm479 = vcmask 523264
    %v480 = vsel %vm479, %v467, %v431
    %v481 = vsel %vm479, %v468, %v433
    %v482 = vsel %vm479, %v469, %v435
    %v483 = vsel %vm479, %v470, %v437
    %v484 = vsel %vm479, %v471, %v439
    %v485 = vsel %vm479, %v472, %v441
    %v486 = vsel %vm479, %v473, %v443
    %v487 = vsel %vm479, %v474, %v445
    %v488 = vsel %vm479, %v475, %v447
    %v489 = vsel %vm479, %v476, %v449
    %v490 = vsel %vm479, %v477, %v451
    %v491 = vsel %vm479, %v478, %v453
    %v492 = vld [vmem:[#allocation2] sm:$0xff]
    %v493 = vld [vmem:[#allocation2 + $0x8] sm:$0xff]
    %v494 = vld [vmem:[#allocation2 + $0x10] sm:$0xff]
    %v495 = vld [vmem:[#allocation2 + $0x18] sm:$0xff]
    %v496 = vld [vmem:[#allocation2 + $0x20] sm:$0xff]
    %v497 = vld [vmem:[#allocation2 + $0x28] sm:$0xff]
    %v498 = vld [vmem:[#allocation2 + $0x30] sm:$0xff]
    %v499 = vld [vmem:[#allocation2 + $0x38] sm:$0xff]
    %v500 = vld [vmem:[#allocation2 + $0x40] sm:$0xff]
    %v501 = vld [vmem:[#allocation2 + $0x48] sm:$0xff]
    %v502 = vld [vmem:[#allocation2 + $0x50] sm:$0xff]
    %v503 = vld [vmem:[#allocation2 + $0x58] sm:$0xff]
    %v504 = vld [vmem:[%s3] sm:$0x1]
    %v506 = vlaneseq
    %v507 = vshrl.u32 %v506, 7
    %v508 = vsub.s32 0, %v507
    %v509 = vrot.slane %v504, %v508
    %vm511 = vcmask 785408
    %v513 = vsel %vm511, %v480, 0
    %v516 = vsel %vm511, %v481, 0
    %v519 = vsel %vm511, %v482, 0
    %v522 = vsel %vm511, %v483, 0
    %v525 = vsel %vm511, %v484, 0
    %v528 = vsel %vm511, %v485, 0
    %v531 = vsel %vm511, %v486, 0
    %v534 = vsel %vm511, %v487, 0
    %v537 = vsel %vm511, %v488, 0
    %v540 = vsel %vm511, %v489, 0
    %v543 = vsel %vm511, %v490, 0
    %v546 = vsel %vm511, %v491, 0
    %548 = vmatprep.subr.mxu0 0.0
    %549 = vmatpush1.msra.mxu0 %v492
    %550 = vmatprep.subr.mxu0 0.0
    %551 = vmatpush1.msra.mxu0 %v493
    %552 = vmatprep.subr.mxu0 0.0
    %553 = vmatpush1.msra.mxu0 %v494
    %554 = vmatprep.subr.mxu0 0.0
    %555 = vmatpush1.msra.mxu0 %v495
    %556 = vmatprep.subr.mxu0 0.0
    %557 = vmatpush1.msra.mxu0 %v496
    %558 = vmatprep.subr.mxu0 0.0
    %559 = vmatpush1.msra.mxu0 %v497
    %560 = vmatprep.subr.mxu0 0.0
    %561 = vmatpush1.msra.mxu0 %v498
    %562 = vmatprep.subr.mxu0 0.0
    %563 = vmatpush1.msra.mxu0 %v499
    %564 = vmatprep.subr.mxu0 0.0
    %565 = vmatpush1.msra.mxu0 %v500
    %566 = vmatprep.subr.mxu0 0.0
    %567 = vmatpush1.msra.mxu0 %v501
    %568 = vmatprep.subr.mxu0 0.0
    %569 = vmatpush1.msra.mxu0 %v502
    %570 = vmatprep.subr.mxu0 0.0
    %571 = vmatpush1.msra.mxu0 %v503
    %572 = vmatprep.subr.mxu0 0.0
    %573 = vmatpush1.msra.mxu0 0.0
    %574 = vmatprep.subr.mxu0 0.0
    %575 = vmatpush1.msra.mxu0 0.0
    %576 = vmatprep.subr.mxu0 0.0
    %577 = vmatpush1.msra.mxu0 0.0
    %578 = vmatprep.subr.mxu0 0.0
    %579 = vmatpush1.msra.mxu0 0.0
    %580 = vmatprep.subr.mxu0 0.0
    %581 = vmatpush1.msra.mxu0 0.0
    %582 = vmatprep.subr.mxu0 0.0
    %583 = vmatpush1.msra.mxu0 0.0
    %584 = vmatprep.subr.mxu0 0.0
    %585 = vmatpush1.msra.mxu0 0.0
    %586 = vmatprep.subr.mxu0 0.0
    %587 = vmatpush1.msra.mxu0 0.0
    %588 = vmatprep.subr.mxu0 0.0
    %589 = vmatpush1.msra.mxu0 0.0
    %590 = vmatprep.subr.mxu0 0.0
    %591 = vmatpush1.msra.mxu0 0.0
    %592 = vmatprep.subr.mxu0 0.0
    %593 = vmatpush1.msra.mxu0 0.0
    %594 = vmatprep.subr.mxu0 0.0
    %595 = vmatpush1.msra.mxu0 0.0
    %596 = vmatprep.subr.mxu0 0.0
    %597 = vmatpush1.msra.mxu0 0.0
    %598 = vmatprep.subr.mxu0 0.0
    %599 = vmatpush1.msra.mxu0 0.0
    %600 = vmatprep.subr.mxu0 0.0
    %601 = vmatpush1.msra.mxu0 0.0
    %602 = vmatprep.subr.mxu0 0.0
    %603 = vmatpush1.msra.mxu0 0.0
    %604 = vmatprep.subr.mxu0 0.0
    %605 = vmatpush1.msra.mxu0 0.0
    %606 = vmatprep.subr.mxu0 0.0
    %607 = vmatpush1.msra.mxu0 0.0
    %608 = vmatprep.subr.mxu0 0.0
    %609 = vmatpush1.msra.mxu0 0.0
    %610 = vmatprep.subr.mxu0 0.0
    %611 = vmatpush1.msra.mxu0 0.0
    %612 = vmatprep.mubr.f32.mxu0 0.0
    %613 = vmatmul.mubr.f32.gmra.mrb[0].mxu0 %v513
    %v614 = vpop.f32.mrb[0].mxu0
    %v615 = vadd.f32 %v509, %v614
    %v616 = vpop.f32.mrb[0].mxu0
    %617 = vmatprep.mubr.f32.mxu0 0.0
    %618 = vmatmul.mubr.f32.gmra.mrb[0].mxu0 %v516
    %v619 = vpop.f32.mrb[0].mxu0
    %v620 = vadd.f32 %v509, %v619
    %v621 = vpop.f32.mrb[0].mxu0
    %622 = vmatprep.mubr.f32.mxu0 0.0
    %623 = vmatmul.mubr.f32.gmra.mrb[0].mxu0 %v519
    %v624 = vpop.f32.mrb[0].mxu0
    %v625 = vadd.f32 %v509, %v624
    %v626 = vpop.f32.mrb[0].mxu0
    %627 = vmatprep.mubr.f32.mxu0 0.0
    %628 = vmatmul.mubr.f32.gmra.mrb[0].mxu0 %v522
    %v629 = vpop.f32.mrb[0].mxu0
    %v630 = vadd.f32 %v509, %v629
    %v631 = vpop.f32.mrb[0].mxu0
    %632 = vmatprep.mubr.f32.mxu0 0.0
    %633 = vmatmul.mubr.f32.gmra.mrb[0].mxu0 %v525
    %v634 = vpop.f32.mrb[0].mxu0
    %v635 = vadd.f32 %v509, %v634
    %v636 = vpop.f32.mrb[0].mxu0
    %637 = vmatprep.mubr.f32.mxu0 0.0
    %638 = vmatmul.mubr.f32.gmra.mrb[0].mxu0 %v528
    %v639 = vpop.f32.mrb[0].mxu0
    %v640 = vadd.f32 %v509, %v639
    %v641 = vpop.f32.mrb[0].mxu0
    %642 = vmatprep.mubr.f32.mxu0 0.0
    %643 = vmatmul.mubr.f32.gmra.mrb[0].mxu0 %v531
    %v644 = vpop.f32.mrb[0].mxu0
    %v645 = vadd.f32 %v509, %v644
    %v646 = vpop.f32.mrb[0].mxu0
    %647 = vmatprep.mubr.f32.mxu0 0.0
    %648 = vmatmul.mubr.f32.gmra.mrb[0].mxu0 %v534
    %v649 = vpop.f32.mrb[0].mxu0
    %v650 = vadd.f32 %v509, %v649
    %v651 = vpop.f32.mrb[0].mxu0
    %652 = vmatprep.mubr.f32.mxu0 0.0
    %653 = vmatmul.mubr.f32.gmra.mrb[0].mxu0 %v537
    %v654 = vpop.f32.mrb[0].mxu0
    %v655 = vadd.f32 %v509, %v654
    %v656 = vpop.f32.mrb[0].mxu0
    %657 = vmatprep.mubr.f32.mxu0 0.0
    %658 = vmatmul.mubr.f32.gmra.mrb[0].mxu0 %v540
    %v659 = vpop.f32.mrb[0].mxu0
    %v660 = vadd.f32 %v509, %v659
    %v661 = vpop.f32.mrb[0].mxu0
    %662 = vmatprep.mubr.f32.mxu0 0.0
    %663 = vmatmul.mubr.f32.gmra.mrb[0].mxu0 %v543
    %v664 = vpop.f32.mrb[0].mxu0
    %v665 = vadd.f32 %v509, %v664
    %v666 = vpop.f32.mrb[0].mxu0
    %667 = vmatprep.mubr.f32.mxu0 0.0
    %668 = vmatmul.mubr.f32.gmra.mrb[0].mxu0 %v546
    %v669 = vpop.f32.mrb[0].mxu0
    %v670 = vadd.f32 %v509, %v669
    %v671 = vpop.f32.mrb[0].mxu0
    %672 = vdwg.mxu0
    %v673 = vmax.f32 %v615, 0.0
    %v674 = vmax.f32 %v620, 0.0
    %v675 = vmax.f32 %v625, 0.0
    %v676 = vmax.f32 %v630, 0.0
    %v677 = vmax.f32 %v635, 0.0
    %v678 = vmax.f32 %v640, 0.0
    %v679 = vmax.f32 %v645, 0.0
    %v680 = vmax.f32 %v650, 0.0
    %v681 = vmax.f32 %v655, 0.0
    %v682 = vmax.f32 %v660, 0.0
    %v683 = vmax.f32 %v665, 0.0
    %v684 = vmax.f32 %v670, 0.0
    %v685 = vadd.s32 %v331, 8
    %vm686 = vcmp.ge.s32.totalorder %v64, 0
    %vm687 = vcmp.lt.s32.totalorder %v64, 16
    %vm688 = vmand %vm686, %vm687
    %v689 = vsel %vm688, 15, 0
    %vm690 = vcmp.ge.s32.totalorder %v64, 16
    %vm691 = vcmp.lt.s32.totalorder %v64, 32
    %vm692 = vmand %vm690, %vm691
    %v693 = vsel %vm692, 14, %v689
    %vm694 = vcmp.lt.s32.totalorder %v331, %v693
    %vm695 = vcmp.lt.s32.totalorder %v685, %v693
    %v696 = vsel %vm694, %v673, 0.0
    %v697 = vsel %vm695, %v674, 0.0
    %v698 = vsel %vm694, %v675, 0.0
    %v699 = vsel %vm695, %v676, 0.0
    %v700 = vsel %vm694, %v677, 0.0
    %v701 = vsel %vm695, %v678, 0.0
    %v702 = vsel %vm694, %v679, 0.0
    %v703 = vsel %vm695, %v680, 0.0
    %v704 = vsel %vm694, %v681, 0.0
    %v705 = vsel %vm695, %v682, 0.0
    %v706 = vsel %vm694, %v683, 0.0
    %v707 = vsel %vm695, %v684, 0.0
    %v708 = vmax.f32 %v696, %v697
    %v709 = vrot.slane %v708, 4
    %v710 = vmax.f32 %v708, %v709
    %v711 = vrot.slane %v710, 2
    %v712 = vmax.f32 %v710, %v711
    %v713 = vrot.slane %v712, 1
    %v714 = vmax.f32 %v712, %v713
    %v715 = vmax.f32 %v698, %v699
    %v716 = vrot.slane %v715, 4
    %v717 = vmax.f32 %v715, %v716
    %v718 = vrot.slane %v717, 2
    %v719 = vmax.f32 %v717, %v718
    %v720 = vrot.slane %v719, 1
    %v721 = vmax.f32 %v719, %v720
    %v722 = vmax.f32 %v700, %v701
    %v723 = vrot.slane %v722, 4
    %v724 = vmax.f32 %v722, %v723
    %v725 = vrot.slane %v724, 2
    %v726 = vmax.f32 %v724, %v725
    %v727 = vrot.slane %v726, 1
    %v728 = vmax.f32 %v726, %v727
    %v729 = vmax.f32 %v702, %v703
    %v730 = vrot.slane %v729, 4
    %v731 = vmax.f32 %v729, %v730
    %v732 = vrot.slane %v731, 2
    %v733 = vmax.f32 %v731, %v732
    %v734 = vrot.slane %v733, 1
    %v735 = vmax.f32 %v733, %v734
    %v736 = vmax.f32 %v704, %v705
    %v737 = vrot.slane %v736, 4
    %v738 = vmax.f32 %v736, %v737
    %v739 = vrot.slane %v738, 2
    %v740 = vmax.f32 %v738, %v739
    %v741 = vrot.slane %v740, 1
    %v742 = vmax.f32 %v740, %v741
    %v743 = vmax.f32 %v706, %v707
    %v744 = vrot.slane %v743, 4
    %v745 = vmax.f32 %v743, %v744
    %v746 = vrot.slane %v745, 2
    %v747 = vmax.f32 %v745, %v746
    %v748 = vrot.slane %v747, 1
    %v749 = vmax.f32 %v747, %v748
    %v750 = vld [vmem:[#allocation4] sm:$0xff]
    %v751 = vld [vmem:[#allocation4 + $0x8] sm:$0xff]
    %v752 = vld [vmem:[#allocation4 + $0x10] sm:$0xff]
    %v753 = vld [vmem:[#allocation4 + $0x18] sm:$0xff]
    %v754 = vld [vmem:[#allocation4 + $0x20] sm:$0xff]
    %v755 = vld [vmem:[#allocation4 + $0x28] sm:$0xff]
    %v756 = vld [vmem:[#allocation4 + $0x30] sm:$0xff]
    %v757 = vld [vmem:[#allocation4 + $0x38] sm:$0xff]
    %v758 = vld [vmem:[#allocation4 + $0x40] sm:$0xff]
    %v759 = vld [vmem:[#allocation4 + $0x48] sm:$0xff]
    %v760 = vld [vmem:[#allocation4 + $0x50] sm:$0xff]
    %v761 = vld [vmem:[#allocation4 + $0x58] sm:$0xff]
    %v762 = vld [vmem:[#allocation4 + $0x60] sm:$0xff]
    %v763 = vld [vmem:[#allocation4 + $0x68] sm:$0xff]
    %v764 = vld [vmem:[#allocation4 + $0x70] sm:$0xff]
    %v765 = vld [vmem:[#allocation4 + $0x78] sm:$0xff]
    %v766 = vld [vmem:[#allocation4 + $0x80] sm:$0xff]
    %v767 = vld [vmem:[#allocation4 + $0x88] sm:$0xff]
    %v768 = vld [vmem:[#allocation4 + $0x90] sm:$0xff]
    %v769 = vld [vmem:[#allocation4 + $0x98] sm:$0xff]
    %v770 = vld [vmem:[#allocation4 + $0xa0] sm:$0xff]
    %v771 = vld [vmem:[#allocation4 + $0xa8] sm:$0xff]
    %v772 = vld [vmem:[#allocation4 + $0xb0] sm:$0xff]
    %v773 = vld [vmem:[#allocation4 + $0xb8] sm:$0xff]
    %v774 = vld [vmem:[#allocation4 + $0xc0] sm:$0xff]
    %v775 = vld [vmem:[#allocation4 + $0xc8] sm:$0xff]
    %v776 = vld [vmem:[#allocation4 + $0xd0] sm:$0xff]
    %v777 = vld [vmem:[#allocation4 + $0xd8] sm:$0xff]
    %v778 = vld [vmem:[#allocation4 + $0xe0] sm:$0xff]
    %v779 = vld [vmem:[#allocation4 + $0xe8] sm:$0xff]
    %v780 = vld [vmem:[#allocation4 + $0xf0] sm:$0xff]
    %v781 = vld [vmem:[#allocation4 + $0xf8] sm:$0xff]
    %v782 = vld [vmem:[%s5] sm:$0x3]
    %v784 = vlaneseq
    %v785 = vshrl.u32 %v784, 7
    %v786 = vsub.s32 0, %v785
    %v787 = vrot.slane %v782, %v786
    %v788 = vlaneseq
    %v789 = vshrl.u32 %v788, 7
    %v790 = vsub.s32 1, %v789
    %v791 = vrot.slane %v782, %v790
    %vm800 = vcmask 1041409
    %v801 = vsel %vm800, %v721, %v714
    %vm802 = vcmask 1042434
    %v803 = vsel %vm802, %v728, %v801
    %vm804 = vcmask 1043459
    %v805 = vsel %vm804, %v735, %v803
    %vm806 = vcmask 1044484
    %v807 = vsel %vm806, %v742, %v805
    %vm808 = vcmask 1045509
    %v809 = vsel %vm808, %v749, %v807
    %811 = vmatprep.subr.mxu0 %v751
    %812 = vmatpush1.msra.mxu0 %v750
    %813 = vmatprep.subr.mxu0 %v753
    %814 = vmatpush1.msra.mxu0 %v752
    %815 = vmatprep.subr.mxu0 %v755
    %816 = vmatpush1.msra.mxu0 %v754
    %817 = vmatprep.subr.mxu0 %v757
    %818 = vmatpush1.msra.mxu0 %v756
    %819 = vmatprep.subr.mxu0 %v759
    %820 = vmatpush1.msra.mxu0 %v758
    %821 = vmatprep.subr.mxu0 %v761
    %822 = vmatpush1.msra.mxu0 %v760
    %823 = vmatprep.subr.mxu0 %v763
    %824 = vmatpush1.msra.mxu0 %v762
    %825 = vmatprep.subr.mxu0 %v765
    %826 = vmatpush1.msra.mxu0 %v764
    %827 = vmatprep.subr.mxu0 %v767
    %828 = vmatpush1.msra.mxu0 %v766
    %829 = vmatprep.subr.mxu0 %v769
    %830 = vmatpush1.msra.mxu0 %v768
    %831 = vmatprep.subr.mxu0 %v771
    %832 = vmatpush1.msra.mxu0 %v770
    %833 = vmatprep.subr.mxu0 %v773
    %834 = vmatpush1.msra.mxu0 %v772
    %835 = vmatprep.subr.mxu0 %v775
    %836 = vmatpush1.msra.mxu0 %v774
    %837 = vmatprep.subr.mxu0 %v777
    %838 = vmatpush1.msra.mxu0 %v776
    %839 = vmatprep.subr.mxu0 %v779
    %840 = vmatpush1.msra.mxu0 %v778
    %841 = vmatprep.subr.mxu0 %v781
    %842 = vmatpush1.msra.mxu0 %v780
    %843 = vmatprep.subr.mxu0 0.0
    %844 = vmatpush1.msra.mxu0 0.0
    %845 = vmatprep.subr.mxu0 0.0
    %846 = vmatpush1.msra.mxu0 0.0
    %847 = vmatprep.subr.mxu0 0.0
    %848 = vmatpush1.msra.mxu0 0.0
    %849 = vmatprep.subr.mxu0 0.0
    %850 = vmatpush1.msra.mxu0 0.0
    %851 = vmatprep.subr.mxu0 0.0
    %852 = vmatpush1.msra.mxu0 0.0
    %853 = vmatprep.subr.mxu0 0.0
    %854 = vmatpush1.msra.mxu0 0.0
    %855 = vmatprep.subr.mxu0 0.0
    %856 = vmatpush1.msra.mxu0 0.0
    %857 = vmatprep.subr.mxu0 0.0
    %858 = vmatpush1.msra.mxu0 0.0
    %859 = vmatprep.subr.mxu0 0.0
    %860 = vmatpush1.msra.mxu0 0.0
    %861 = vmatprep.subr.mxu0 0.0
    %862 = vmatpush1.msra.mxu0 0.0
    %863 = vmatprep.subr.mxu0 0.0
    %864 = vmatpush1.msra.mxu0 0.0
    %865 = vmatprep.subr.mxu0 0.0
    %866 = vmatpush1.msra.mxu0 0.0
    %867 = vmatprep.subr.mxu0 0.0
    %868 = vmatpush1.msra.mxu0 0.0
    %869 = vmatprep.subr.mxu0 0.0
    %870 = vmatpush1.msra.mxu0 0.0
    %871 = vmatprep.subr.mxu0 0.0
    %872 = vmatpush1.msra.mxu0 0.0
    %873 = vmatprep.subr.mxu0 0.0
    %874 = vmatpush1.msra.mxu0 0.0
    %875 = vmatprep.mubr.f32.mxu0 0.0
    %876 = vmatmul.mubr.f32.gmra.mrb[0].mxu0 %v809
    %v877 = vpop.f32.mrb[0].mxu0
    %v878 = vadd.f32 %v787, %v877
    %v879 = vpop.f32.mrb[0].mxu0
    %v880 = vadd.f32 %v791, %v879
    %881 = vdwg.mxu0
    %v882 = vmax.f32 %v878, 0.0
    %v883 = vxor.u32 %v880, 2147483648
    %v884 = vmul.f32 %v883, 1.442695
    %v885 = vpow.pop %v884
    %v886 = vadd.f32 %v885, 1.0
    %v887 = vrcp.pop %v886
    %v888 = vmul.f32 1.0, %v887
    %v889 = vsub.f32 %v882, %v809
    %v890 = vmul.f32 %v888, %v889
    %v892 = vrot.slane %v890, 1
    %v893 = vrot.slane %v890, 2
    %v894 = vrot.slane %v890, 3
    %v895 = vrot.slane %v890, 4
    %v896 = vrot.slane %v890, 5
    %v903 = vadd.f32 %v714, %v890
    %v904 = vadd.f32 %v721, %v892
    %v905 = vadd.f32 %v728, %v893
    %v906 = vadd.f32 %v735, %v894
    %v907 = vadd.f32 %v742, %v895
    %v908 = vadd.f32 %v749, %v896
    %v915 = vrot.slane %v904, 7
    %v916 = vsel %vm800, %v915, %v903
    %v917 = vrot.slane %v905, 6
    %v918 = vsel %vm802, %v917, %v916
    %v919 = vrot.slane %v906, 5
    %v920 = vsel %vm804, %v919, %v918
    %v921 = vrot.slane %v907, 4
    %v922 = vsel %vm806, %v921, %v920
    %v923 = vrot.slane %v908, 3
    %v924 = vsel %vm808, %v923, %v922
    %vm926 = vcmask 1045504
    %v927 = vsel %vm926, %v924, 0.0
    %928 = vadd.xlane.f32.xlu0 %v927
    %v929 = vpop.xlane.xlu0 %928
    %v930 = vmul.f32 %v929, 0.03125
    %v932 = vrot.slane %v930, 1
    %v933 = vrot.slane %v930, 2
    %v934 = vrot.slane %v930, 3
    %v935 = vrot.slane %v930, 4
    %v936 = vrot.slane %v930, 5
    %v943 = vsub.f32 %v903, %v930
    %v944 = vsub.f32 %v904, %v932
    %v945 = vsub.f32 %v905, %v933
    %v946 = vsub.f32 %v906, %v934
    %v947 = vsub.f32 %v907, %v935
    %v948 = vsub.f32 %v908, %v936
    %v949 = vsel %vm691, 1, 0
    %vm950 = vcmp.eq.s32.totalorder %v949, 1
    %v957 = vrot.slane %v944, 7
    %v958 = vsel %vm800, %v957, %v943
    %v959 = vrot.slane %v945, 6
    %v960 = vsel %vm802, %v959, %v958
    %v961 = vrot.slane %v946, 5
    %v962 = vsel %vm804, %v961, %v960
    %v963 = vrot.slane %v947, 4
    %v964 = vsel %vm806, %v963, %v962
    %v965 = vrot.slane %v948, 3
    %v966 = vsel %vm808, %v965, %v964
    %v968 = vsel %vm950, %v966, 0.0
    %v969 = vmul.f32 %v968, %v968
    %v970 = vsel %vm926, %v969, 0.0
    %971 = vadd.xlane.f32.xlu0 %v970
    %v972 = vpop.xlane.xlu0 %971
    %v973 = vmul.f32 %v972, 0.03125
    %v974 = vadd.f32 %v973, 1e-05
    %v975 = vrsqrt.pop %v974
    %v977 = vrot.slane %v975, 1
    %v978 = vrot.slane %v975, 2
    %v979 = vrot.slane %v975, 3
    %v980 = vrot.slane %v975, 4
    %v981 = vrot.slane %v975, 5
    %v988 = vmul.f32 %v943, %v975
    %v989 = vmul.f32 %v944, %v977
    %v990 = vmul.f32 %v945, %v978
    %v991 = vmul.f32 %v946, %v979
    %v992 = vmul.f32 %v947, %v980
    %v993 = vmul.f32 %v948, %v981
    %v994 = vld [vmem:[%s6] sm:$0x1]
    %v996 = vlaneseq
    %v997 = vshrl.u32 %v996, 7
    %v998 = vsub.s32 0, %v997
    %v999 = vrot.slane %v994, %v998
    %v1001 = vmul.f32 %v988, %v999
    %v1002 = vmul.f32 %v989, %v999
    %v1003 = vmul.f32 %v990, %v999
    %v1004 = vmul.f32 %v991, %v999
    %v1005 = vmul.f32 %v992, %v999
    %v1006 = vmul.f32 %v993, %v999
    %v1007 = vld [vmem:[%s7] sm:$0x1]
    %v1009 = vlaneseq
    %v1010 = vshrl.u32 %v1009, 7
    %v1011 = vsub.s32 0, %v1010
    %v1012 = vrot.slane %v1007, %v1011
    %v1014 = vadd.f32 %v1001, %v1012
    %v1015 = vadd.f32 %v1002, %v1012
    %v1016 = vadd.f32 %v1003, %v1012
    %v1017 = vadd.f32 %v1004, %v1012
    %v1018 = vadd.f32 %v1005, %v1012
    %v1019 = vadd.f32 %v1006, %v1012
    %v1020 = vld [vmem:[%s8] sm:$0xff]
    %v1021 = vld [vmem:[%s8 + $0x8] sm:$0xff]
    %v1022 = vld [vmem:[%s8 + $0x10] sm:$0xff]
    %v1023 = vld [vmem:[%s8 + $0x18] sm:$0xff]
    %v1024 = vld [vmem:[%s8 + $0x20] sm:$0xff]
    %v1025 = vld [vmem:[%s8 + $0x28] sm:$0xff]
    %v1026 = vld [vmem:[%s8 + $0x30] sm:$0xff]
    %v1027 = vld [vmem:[%s8 + $0x38] sm:$0xff]
    %v1028 = vld [vmem:[%s8 + $0x40] sm:$0xff]
    %v1029 = vld [vmem:[%s8 + $0x48] sm:$0xff]
    %v1030 = vld [vmem:[%s8 + $0x50] sm:$0xff]
    %v1031 = vld [vmem:[%s8 + $0x58] sm:$0xff]
    %v1032 = vld [vmem:[%s8 + $0x60] sm:$0xff]
    %v1033 = vld [vmem:[%s8 + $0x68] sm:$0xff]
    %v1034 = vld [vmem:[%s8 + $0x70] sm:$0xff]
    %v1035 = vld [vmem:[%s8 + $0x78] sm:$0xff]
    %v1036 = vld [vmem:[%s9] sm:$0x1]
    %v1038 = vlaneseq
    %v1039 = vshrl.u32 %v1038, 7
    %v1040 = vsub.s32 0, %v1039
    %v1041 = vrot.slane %v1036, %v1040
    %v1049 = vrot.slane %v1015, 7
    %v1050 = vsel %vm800, %v1049, %v1014
    %v1051 = vrot.slane %v1016, 6
    %v1052 = vsel %vm802, %v1051, %v1050
    %v1053 = vrot.slane %v1017, 5
    %v1054 = vsel %vm804, %v1053, %v1052
    %v1055 = vrot.slane %v1018, 4
    %v1056 = vsel %vm806, %v1055, %v1054
    %v1057 = vrot.slane %v1019, 3
    %v1058 = vsel %vm808, %v1057, %v1056
    %1060 = vmatprep.subr.mxu0 0.0
    %1061 = vmatpush1.msra.mxu0 %v1020
    %1062 = vmatprep.subr.mxu0 0.0
    %1063 = vmatpush1.msra.mxu0 %v1021
    %1064 = vmatprep.subr.mxu0 0.0
    %1065 = vmatpush1.msra.mxu0 %v1022
    %1066 = vmatprep.subr.mxu0 0.0
    %1067 = vmatpush1.msra.mxu0 %v1023
    %1068 = vmatprep.subr.mxu0 0.0
    %1069 = vmatpush1.msra.mxu0 %v1024
    %1070 = vmatprep.subr.mxu0 0.0
    %1071 = vmatpush1.msra.mxu0 %v1025
    %1072 = vmatprep.subr.mxu0 0.0
    %1073 = vmatpush1.msra.mxu0 %v1026
    %1074 = vmatprep.subr.mxu0 0.0
    %1075 = vmatpush1.msra.mxu0 %v1027
    %1076 = vmatprep.subr.mxu0 0.0
    %1077 = vmatpush1.msra.mxu0 %v1028
    %1078 = vmatprep.subr.mxu0 0.0
    %1079 = vmatpush1.msra.mxu0 %v1029
    %1080 = vmatprep.subr.mxu0 0.0
    %1081 = vmatpush1.msra.mxu0 %v1030
    %1082 = vmatprep.subr.mxu0 0.0
    %1083 = vmatpush1.msra.mxu0 %v1031
    %1084 = vmatprep.subr.mxu0 0.0
    %1085 = vmatpush1.msra.mxu0 %v1032
    %1086 = vmatprep.subr.mxu0 0.0
    %1087 = vmatpush1.msra.mxu0 %v1033
    %1088 = vmatprep.subr.mxu0 0.0
    %1089 = vmatpush1.msra.mxu0 %v1034
    %1090 = vmatprep.subr.mxu0 0.0
    %1091 = vmatpush1.msra.mxu0 %v1035
    %1092 = vmatprep.subr.mxu0 0.0
    %1093 = vmatpush1.msra.mxu0 0.0
    %1094 = vmatprep.subr.mxu0 0.0
    %1095 = vmatpush1.msra.mxu0 0.0
    %1096 = vmatprep.subr.mxu0 0.0
    %1097 = vmatpush1.msra.mxu0 0.0
    %1098 = vmatprep.subr.mxu0 0.0
    %1099 = vmatpush1.msra.mxu0 0.0
    %1100 = vmatprep.subr.mxu0 0.0
    %1101 = vmatpush1.msra.mxu0 0.0
    %1102 = vmatprep.subr.mxu0 0.0
    %1103 = vmatpush1.msra.mxu0 0.0
    %1104 = vmatprep.subr.mxu0 0.0
    %1105 = vmatpush1.msra.mxu0 0.0
    %1106 = vmatprep.subr.mxu0 0.0
    %1107 = vmatpush1.msra.mxu0 0.0
    %1108 = vmatprep.subr.mxu0 0.0
    %1109 = vmatpush1.msra.mxu0 0.0
    %1110 = vmatprep.subr.mxu0 0.0
    %1111 = vmatpush1.msra.mxu0 0.0
    %1112 = vmatprep.subr.mxu0 0.0
    %1113 = vmatpush1.msra.mxu0 0.0
    %1114 = vmatprep.subr.mxu0 0.0
    %1115 = vmatpush1.msra.mxu0 0.0
    %1116 = vmatprep.subr.mxu0 0.0
    %1117 = vmatpush1.msra.mxu0 0.0
    %1118 = vmatprep.subr.mxu0 0.0
    %1119 = vmatpush1.msra.mxu0 0.0
    %1120 = vmatprep.subr.mxu0 0.0
    %1121 = vmatpush1.msra.mxu0 0.0
    %1122 = vmatprep.subr.mxu0 0.0
    %1123 = vmatpush1.msra.mxu0 0.0
    %1124 = vmatprep.mubr.f32.mxu0 0.0
    %1125 = vmatmul.mubr.f32.gmra.mrb[0].mxu0 %v1058
    %v1126 = vpop.f32.mrb[0].mxu0
    %v1127 = vadd.f32 %v1041, %v1126
    %v1128 = vpop.f32.mrb[0].mxu0
    %1129 = vdwg.mxu0
    %1130 = vst [vmem:[%s10] sm:$0x3f] %v1127
    // Predicated region
    $region50: #{tpu_custom_call.1} parent=1 // pred_check
      _
    $region51: #{tpu_custom_call.1} parent=1 // pred_check_branch
      %1132 = sbr.rel (0) target = $region53
    $region52: #{tpu_custom_call.1} parent=1 // pred_region
      _
    $region53: #{tpu_custom_call.1} parent=1 // pred_fallthru
      _
    // Predicated region
    $region54: #{tpu_custom_call.1} parent=1 // pred_check
      _
    $region55: #{tpu_custom_call.1} parent=1 // pred_check_branch
      %1134 = sbr.rel (0) target = $region57
    $region56: #{tpu_custom_call.1} parent=1 // pred_region
      _
    $region57: #{tpu_custom_call.1} parent=1 // pred_fallthru
      _
    %1135 = vsyncpa [#allocation3], 1
    %1136 = vsyncpa [#allocation5], 1

</llo_original>
